<compile_context>
chip_gen: v5e
topology: v5e:2x2
jax: 0.10.0
libtpu: 0.0.40
codegen_flags: <defaults>
</compile_context>

<pallas_src>
import jax
import jax.numpy as jnp
from jax.experimental import pallas as pl
from jax.experimental.pallas import tpu as pltpu


def _softplus(t):
    # numerically stable softplus: max(t,0) + log(1 + exp(-|t|))   (1 exp + 1 log)
    return jnp.maximum(t, 0.0) + jnp.log(1.0 + jnp.exp(-jnp.abs(t)))


def _log_g(v):
    # torch: where(x >= 0, log(relu(x) + 0.5), -softplus(-x))
    # rewritten with ONE exp + ONE log:
    #   x >= 0 : log(x + 0.5)
    #   x <  0 : -softplus(-x) = x - log(1 + exp(x))
    pos = v >= 0.0
    e = jnp.exp(jnp.minimum(v, 0.0))          # exp(v) for v<0, 1 otherwise (no overflow)
    w = jnp.where(pos, v + 0.5, 1.0 + e)      # always >= 0.5, log is safe
    lw = jnp.log(w)
    return jnp.where(pos, lw, v - lw)


def _mini_gru_kernel(x_ref, h0_ref, w_ref, b_ref, ftri_ref, ttri_ref, out_ref):
    Bb, T, Din = x_ref.shape
    D = h0_ref.shape[-1]

    # ---- fused gate matmul: x @ [Wz | Wh], one MXU call for the whole batch
    #      block, f32 accumulation ----
    x2d = x_ref[...].reshape(Bb * T, Din)
    z2d = jnp.dot(x2d, w_ref[...], preferred_element_type=jnp.float32) + b_ref[...]
    zk = z2d[:, :D]          # linear_z(x)   (Bb*T, D)
    zh = z2d[:, D:]          # linear_h(x)   (Bb*T, D)

    # ---- gate log-probabilities: single softplus, derive the other via
    #      softplus(-k) = softplus(k) - k ----
    sp = _softplus(zk)
    log_coeffs = -sp                       # = -softplus(k)
    log_z = zk - sp                        # = -softplus(-k)
    log_th = _log_g(zh)                    # log_g(linear_h(x))

    # ---- cumsum(log_coeffs, dim=-1) over the FEATURE axis (exactly as in the
    #      reference), as one matmul with a resident upper-triangular constant.
    #      f32 data side on purpose (MXU has slack; keeps summation accurate). ----
    csum2 = jnp.dot(log_coeffs, ftri_ref[...],
                    preferred_element_type=jnp.float32)              # (Bb*T, D)

    v1 = (log_z + log_th - csum2).reshape(Bb, T, D)   # rows 1..T of (log_values - a_star)
    csum = csum2.reshape(Bb, T, D)                    # a_star rows 1..T  (row 0 is 0)

    h0 = h0_ref[...]                                  # (Bb, 1, D)
    log_h0 = _log_g(h0)

    # ---- stabilized logcumsumexp over TIME, with the exp/log pair fused:
    #        h[1:] = exp(a_star + m) * (ev0 + tril @ exp(v1 - m))
    #      (a_star + m is moderate for rows >= 1; row 0 is handled exactly) ----
    m = jnp.maximum(jnp.max(v1, axis=1, keepdims=True), log_h0)      # (Bb, 1, D)
    ev0 = jnp.exp(log_h0 - m)                                        # (Bb, 1, D)
    ev1 = jnp.exp(v1 - m)                                            # (Bb, T, D)
    scale1 = jnp.exp(csum + m)                                       # (Bb, T, D)

    # Per-batch inclusive prefix-sum over time against a single (T, T)
    # lower-triangular constant (no block-diagonal zero-padding on the MXU).
    ttri = ttri_ref[...]
    ct1 = jnp.stack(
        [jnp.dot(ttri, ev1[b], preferred_element_type=jnp.float32)
         for b in range(Bb)],
        axis=0)                                                      # (Bb, T, D)

    rows = scale1 * (ev0 + ct1)                                      # h rows 1..T

    # Row 0 directly as g(h0) (no exp(log_g(h0)) round-trip).
    e0 = jnp.exp(jnp.minimum(h0, 0.0))
    row0 = jnp.where(h0 >= 0.0, h0 + 0.5, e0 / (1.0 + e0))           # (Bb, 1, D)

    # Single full-block aligned store of the whole (Bb, T+1, D) output tile.
    out_ref[...] = jnp.concatenate([row0, rows], axis=1).astype(out_ref.dtype)


# ----------------------------------------------------------------------------
# Wrapper: per-generation block sizing + explicit VMEM budget.
# ----------------------------------------------------------------------------

_VMEM_BUDGET = 40 * 1024 * 1024   # conservative: fits v7x's 64 MiB physical VMEM


def _num_tensorcores_per_chip():
    try:
        kind = jax.devices()[0].device_kind.lower()
    except Exception:
        return 1
    return 2 if ("v7" in kind or "7x" in kind) else 1


def _vmem_bytes_estimate(Bb, T, Din, Dout, x_itemsize):
    blk_x = Bb * T * Din * x_itemsize
    blk_out = Bb * (T + 1) * Dout * 4
    consts = (Din * 2 * Dout * x_itemsize + 2 * Dout * 4
              + Dout * Dout * 4 + T * T * 4)
    # ~12 live f32 temporaries of roughly (Bb*T, Dout) plus the (Bb*T, 2*Dout)
    # fused-gate output.
    live = (12 * Bb * T * Dout + 2 * Bb * T * 2 * Dout) * 4
    # pipelined inputs/outputs/constants are double-buffered by default
    return 2 * (blk_x + blk_out + consts) + live


def _pick_block_batch(B, T, Din, Dout, x_itemsize, num_cores, cap=16):
    """v5e/v6e (1 TC): largest batch block fitting the VMEM budget (fewer grid
    steps, bigger gate-matmul M).  v7x (2 TCs): additionally prefer a grid that
    splits evenly across both TensorCores."""
    divisors = [d for d in range(1, min(B, cap) + 1) if B % d == 0]
    fits = [d for d in divisors
            if _vmem_bytes_estimate(d, T, Din, Dout, x_itemsize) <= _VMEM_BUDGET]
    if not fits:
        fits = [1]
    if num_cores > 1:
        even = [d for d in fits if (B // d) % num_cores == 0]
        if even:
            return max(even)
    return max(fits)


def mini_gru_parallel(x, h0, Wz, bz, Wh, bh, *, block_batch=None,
                      matmul_dtype=jnp.float32):
    """Forward of MiniGRUParallelCell.

    x : (B, T, Din) f32, h0 : (B, 1, Dout) f32,
    Wz/Wh : (Din, Dout) (transpose of nn.Linear.weight), bz/bh : (1, Dout).
    Returns h : (B, T+1, Dout) f32.

    matmul_dtype=float32 (default) gives exact parity with the PyTorch module;
    bfloat16 halves the x / weight DMA bytes at the cost of gate-matmul precision.
    """
    B, T, Din = x.shape
    Dout = Wz.shape[1]

    x_itemsize = jnp.dtype(matmul_dtype).itemsize
    num_cores = _num_tensorcores_per_chip()
    Bb = (_pick_block_batch(B, T, Din, Dout, x_itemsize, num_cores)
          if block_batch is None else block_batch)
    assert B % Bb == 0, (B, Bb)

    # Operands (cast once, wrapper-side).
    x_in = x.astype(matmul_dtype)
    W_cat = jnp.concatenate([Wz, Wh], axis=1).astype(matmul_dtype)    # (Din, 2*Dout)
    b_cat = jnp.concatenate([bz, bh], axis=1).astype(jnp.float32)     # (1, 2*Dout)

    # Resident triangular constants (hoisted out of the kernel body).
    ftri = jnp.triu(jnp.ones((Dout, Dout), jnp.float32))              # feature cumsum
    ttri = jnp.tril(jnp.ones((T, T), jnp.float32))                    # time prefix-sum

    est = _vmem_bytes_estimate(Bb, T, Din, Dout, x_itemsize)
    vmem_limit = int(min(max(2 * est, 32 * 1024 * 1024), 48 * 1024 * 1024))

    flops = (2 * B * T * Din * 2 * Dout          # fused gate matmul
             + 2 * B * T * Dout * Dout           # feature-axis cumsum matmul
             + 2 * B * T * T * Dout              # per-batch time prefix-sum matmul
             + 25 * B * (T + 1) * Dout)          # elementwise epilogue
    transcendentals = 6 * B * T * Dout + 3 * B * Dout
    bytes_accessed = (x_in.size * x_itemsize + h0.size * 4
                      + W_cat.size * x_itemsize + b_cat.size * 4
                      + ftri.size * 4 + ttri.size * 4
                      + B * (T + 1) * Dout * 4)

    return pl.pallas_call(
        _mini_gru_kernel,
        out_shape=jax.ShapeDtypeStruct((B, T + 1, Dout), jnp.float32),
        grid=(B // Bb,),
        in_specs=[
            pl.BlockSpec((Bb, T, Din), lambda i: (i, 0, 0)),          # x (batch block)
            pl.BlockSpec((Bb, 1, Dout), lambda i: (i, 0, 0)),         # h_0
            pl.BlockSpec((Din, 2 * Dout), lambda i: (0, 0)),          # [Wz | Wh]
            pl.BlockSpec((1, 2 * Dout), lambda i: (0, 0)),            # [bz | bh]
            pl.BlockSpec((Dout, Dout), lambda i: (0, 0)),             # feature tri
            pl.BlockSpec((T, T), lambda i: (0, 0)),                   # time tri
        ],
        out_specs=pl.BlockSpec((Bb, T + 1, Dout), lambda i: (i, 0, 0)),
        compiler_params=pltpu.CompilerParams(
            dimension_semantics=("parallel",),
            vmem_limit_bytes=vmem_limit),
        cost_estimate=pl.CostEstimate(flops=flops,
                                      transcendentals=transcendentals,
                                      bytes_accessed=bytes_accessed),
    )(x_in, h0, W_cat, b_cat, ftri, ttri)


def _reference_forward(x, h0, Wz, bz, Wh, bh):
    # Pure-JAX mirror of MiniGRUParallelCell.forward (f32 everywhere).
    k = jnp.dot(x, Wz, preferred_element_type=jnp.float32) + bz
    zh = jnp.dot(x, Wh, preferred_element_type=jnp.float32) + bh
    log_z = -jax.nn.softplus(-k)
    log_coeffs = -jax.nn.softplus(k)

    def log_g(v):
        return jnp.where(v >= 0, jnp.log(jnp.maximum(v, 0.0) + 0.5),
                         -jax.nn.softplus(-v))

    log_values = jnp.concatenate([log_g(h0), log_z + log_g(zh)], axis=1)
    a_star = jnp.pad(jnp.cumsum(log_coeffs, axis=-1), ((0, 0), (1, 0), (0, 0)))
    v = log_values - a_star
    m = jnp.max(v, axis=1, keepdims=True)
    log_cse = jnp.log(jnp.cumsum(jnp.exp(v - m), axis=1)) + m
    return jnp.exp(a_star + log_cse)


if __name__ == "__main__":
    B, T, Din, Dout = 2, 8, 16, 32
    key = jax.random.PRNGKey(0)
    ks = jax.random.split(key, 6)

    x = jax.random.normal(ks[0], (B, T, Din), dtype=jnp.float32)
    h0 = jax.random.normal(ks[1], (B, 1, Dout), dtype=jnp.float32)

    # Deterministic synthetic parameters (nn.Linear-style uniform init).
    bound = 1.0 / (Din ** 0.5)
    Wz = jax.random.uniform(ks[2], (Din, Dout), jnp.float32, -bound, bound)
    bz = jax.random.uniform(ks[3], (1, Dout), jnp.float32, -bound, bound)
    Wh = jax.random.uniform(ks[4], (Din, Dout), jnp.float32, -bound, bound)
    bh = jax.random.uniform(ks[5], (1, Dout), jnp.float32, -bound, bound)

    h = mini_gru_parallel(x, h0, Wz, bz, Wh, bh)
    jax.block_until_ready(h)
    assert h.shape == (B, T + 1, Dout), h.shape
    assert bool(jnp.all(jnp.isfinite(h)))

    # Correctness check against a pure-JAX f32 reference.
    ref = _reference_forward(x, h0, Wz, bz, Wh, bh)
    max_err = float(jnp.max(jnp.abs(h - ref)))
    assert bool(jnp.allclose(h, ref, rtol=1e-2, atol=1e-3)), max_err

    print("KERNEL_OK")
</pallas_src>

<mosaic_0001>
module attributes {stable_mosaic.version = 11 : i64} {
  func.func @_mini_gru_kernel(%arg0: i32, %arg1: memref<2x8x16xf32, #tpu.memory_space<vmem>>, %arg2: memref<2x1x32xf32, #tpu.memory_space<vmem>>, %arg3: memref<16x64xf32, #tpu.memory_space<vmem>>, %arg4: memref<1x64xf32, #tpu.memory_space<vmem>>, %arg5: memref<32x32xf32, #tpu.memory_space<vmem>>, %arg6: memref<8x8xf32, #tpu.memory_space<vmem>>, %arg7: memref<2x9x32xf32, #tpu.memory_space<vmem>>) attributes {dimension_semantics = [#tpu.dimension_semantics<parallel>], iteration_bounds = array<i64: 1>, scalar_prefetch = 0 : i64, scratch_operands = 0 : i64, tpu.core_type = #tpu.core_type<tc>, window_params = [{transform_indices = @transform_0, window_bounds = array<i64: 2, 8, 16>}, {transform_indices = @transform_1, window_bounds = array<i64: 2, 1, 32>}, {pipeline_mode = #tpu.pipeline_mode<synchronous>, transform_indices = @transform_2, window_bounds = array<i64: 16, 64>}, {pipeline_mode = #tpu.pipeline_mode<synchronous>, transform_indices = @transform_3, window_bounds = array<i64: 1, 64>}, {pipeline_mode = #tpu.pipeline_mode<synchronous>, transform_indices = @transform_4, window_bounds = array<i64: 32, 32>}, {pipeline_mode = #tpu.pipeline_mode<synchronous>, transform_indices = @transform_5, window_bounds = array<i64: 8, 8>}, {transform_indices = @transform_6, window_bounds = array<i64: 2, 9, 32>}]} {
    %c0 = arith.constant 0 : index
    %c0_0 = arith.constant 0 : index
    %c0_1 = arith.constant 0 : index
    %0 = vector.load %arg1[%c0, %c0_0, %c0_1] : memref<2x8x16xf32, #tpu.memory_space<vmem>>, vector<2x8x16xf32>
    %1 = vector.shape_cast %0 : vector<2x8x16xf32> to vector<16x16xf32>
    %c0_2 = arith.constant 0 : index
    %c0_3 = arith.constant 0 : index
    %2 = vector.load %arg3[%c0_2, %c0_3] : memref<16x64xf32, #tpu.memory_space<vmem>>, vector<16x64xf32>
    %cst = arith.constant dense<0.000000e+00> : vector<16x64xf32>
    %3 = tpu.matmul %1, %2, %cst {dimension_numbers = #tpu.dot_dimension_numbers<[1], [0], [0], [1], [0, 0, 1, 1], [], []>} : vector<16x16xf32>, vector<16x64xf32>, vector<16x64xf32> -> vector<16x64xf32>
    %c0_4 = arith.constant 0 : index
    %c0_5 = arith.constant 0 : index
    %4 = vector.load %arg4[%c0_4, %c0_5] : memref<1x64xf32, #tpu.memory_space<vmem>>, vector<1x64xf32>
    %5 = vector.broadcast %4 : vector<1x64xf32> to vector<16x64xf32>
    %6 = arith.addf %3, %5 : vector<16x64xf32>
    %7 = vector.extract_strided_slice %6 {offsets = [0, 0], sizes = [16, 32], strides = [1, 1]} : vector<16x64xf32> to vector<16x32xf32>
    %8 = vector.extract_strided_slice %6 {offsets = [0, 32], sizes = [16, 32], strides = [1, 1]} : vector<16x64xf32> to vector<16x32xf32>
    %cst_6 = arith.constant 0.000000e+00 : f32
    %9 = vector.broadcast %cst_6 : f32 to vector<16x32xf32>
    %10 = arith.maximumf %7, %9 : vector<16x32xf32>
    %11 = math.absf %7 : vector<16x32xf32>
    %cst_7 = arith.constant 0.000000e+00 : f32
    %12 = vector.broadcast %cst_7 : f32 to vector<16x32xf32>
    %13 = arith.subf %12, %11 : vector<16x32xf32>
    %14 = math.exp %13 : vector<16x32xf32>
    %cst_8 = arith.constant 1.000000e+00 : f32
    %15 = vector.broadcast %cst_8 : f32 to vector<16x32xf32>
    %16 = arith.addf %15, %14 : vector<16x32xf32>
    %17 = math.log %16 : vector<16x32xf32>
    %18 = arith.addf %10, %17 : vector<16x32xf32>
    %cst_9 = arith.constant 0.000000e+00 : f32
    %19 = vector.broadcast %cst_9 : f32 to vector<16x32xf32>
    %20 = arith.subf %19, %18 : vector<16x32xf32>
    %21 = arith.subf %7, %18 : vector<16x32xf32>
    %cst_10 = arith.constant 0.000000e+00 : f32
    %22 = vector.broadcast %cst_10 : f32 to vector<16x32xf32>
    %23 = arith.cmpf oge, %8, %22 : vector<16x32xf32>
    %cst_11 = arith.constant 0.000000e+00 : f32
    %24 = vector.broadcast %cst_11 : f32 to vector<16x32xf32>
    %25 = arith.minimumf %8, %24 : vector<16x32xf32>
    %26 = math.exp %25 : vector<16x32xf32>
    %cst_12 = arith.constant 5.000000e-01 : f32
    %27 = vector.broadcast %cst_12 : f32 to vector<16x32xf32>
    %28 = arith.addf %8, %27 : vector<16x32xf32>
    %cst_13 = arith.constant 1.000000e+00 : f32
    %29 = vector.broadcast %cst_13 : f32 to vector<16x32xf32>
    %30 = arith.addf %29, %26 : vector<16x32xf32>
    %31 = arith.select %23, %28, %30 : vector<16x32xi1>, vector<16x32xf32>
    %32 = math.log %31 : vector<16x32xf32>
    %33 = arith.subf %8, %32 : vector<16x32xf32>
    %34 = arith.select %23, %32, %33 : vector<16x32xi1>, vector<16x32xf32>
    %c0_14 = arith.constant 0 : index
    %c0_15 = arith.constant 0 : index
    %35 = vector.load %arg5[%c0_14, %c0_15] : memref<32x32xf32, #tpu.memory_space<vmem>>, vector<32x32xf32>
    %cst_16 = arith.constant dense<0.000000e+00> : vector<16x32xf32>
    %36 = tpu.matmul %20, %35, %cst_16 {dimension_numbers = #tpu.dot_dimension_numbers<[1], [0], [0], [1], [0, 0, 1, 1], [], []>} : vector<16x32xf32>, vector<32x32xf32>, vector<16x32xf32> -> vector<16x32xf32>
    %37 = arith.addf %21, %34 : vector<16x32xf32>
    %38 = arith.subf %37, %36 : vector<16x32xf32>
    %39 = vector.shape_cast %38 : vector<16x32xf32> to vector<2x8x32xf32>
    %40 = vector.shape_cast %36 : vector<16x32xf32> to vector<2x8x32xf32>
    %c0_17 = arith.constant 0 : index
    %c0_18 = arith.constant 0 : index
    %c0_19 = arith.constant 0 : index
    %41 = vector.load %arg2[%c0_17, %c0_18, %c0_19] : memref<2x1x32xf32, #tpu.memory_space<vmem>>, vector<2x1x32xf32>
    %cst_20 = arith.constant 0.000000e+00 : f32
    %42 = vector.broadcast %cst_20 : f32 to vector<2x1x32xf32>
    %43 = arith.cmpf oge, %41, %42 : vector<2x1x32xf32>
    %cst_21 = arith.constant 0.000000e+00 : f32
    %44 = vector.broadcast %cst_21 : f32 to vector<2x1x32xf32>
    %45 = arith.minimumf %41, %44 : vector<2x1x32xf32>
    %46 = math.exp %45 : vector<2x1x32xf32>
    %cst_22 = arith.constant 5.000000e-01 : f32
    %47 = vector.broadcast %cst_22 : f32 to vector<2x1x32xf32>
    %48 = arith.addf %41, %47 : vector<2x1x32xf32>
    %cst_23 = arith.constant 1.000000e+00 : f32
    %49 = vector.broadcast %cst_23 : f32 to vector<2x1x32xf32>
    %50 = arith.addf %49, %46 : vector<2x1x32xf32>
    %51 = arith.select %43, %48, %50 : vector<2x1x32xi1>, vector<2x1x32xf32>
    %52 = math.log %51 : vector<2x1x32xf32>
    %53 = arith.subf %41, %52 : vector<2x1x32xf32>
    %54 = arith.select %43, %52, %53 : vector<2x1x32xi1>, vector<2x1x32xf32>
    %cst_24 = arith.constant dense<0xFF800000> : vector<2x32xf32>
    %55 = vector.multi_reduction <maximumf>, %39, %cst_24 [1] : vector<2x8x32xf32> to vector<2x32xf32>
    %56 = vector.shape_cast %55 : vector<2x32xf32> to vector<2x1x32xf32>
    %57 = arith.maximumf %56, %54 : vector<2x1x32xf32>
    %58 = arith.subf %54, %57 : vector<2x1x32xf32>
    %59 = math.exp %58 : vector<2x1x32xf32>
    %60 = vector.broadcast %57 : vector<2x1x32xf32> to vector<2x8x32xf32>
    %61 = arith.subf %39, %60 : vector<2x8x32xf32>
    %62 = math.exp %61 : vector<2x8x32xf32>
    %63 = vector.broadcast %57 : vector<2x1x32xf32> to vector<2x8x32xf32>
    %64 = arith.addf %40, %63 : vector<2x8x32xf32>
    %65 = math.exp %64 : vector<2x8x32xf32>
    %c0_25 = arith.constant 0 : index
    %c0_26 = arith.constant 0 : index
    %66 = vector.load %arg6[%c0_25, %c0_26] : memref<8x8xf32, #tpu.memory_space<vmem>>, vector<8x8xf32>
    %67 = vector.extract_strided_slice %62 {offsets = [0, 0, 0], sizes = [1, 8, 32], strides = [1, 1, 1]} : vector<2x8x32xf32> to vector<1x8x32xf32>
    %68 = vector.shape_cast %67 : vector<1x8x32xf32> to vector<8x32xf32>
    %cst_27 = arith.constant dense<0.000000e+00> : vector<8x32xf32>
    %69 = tpu.matmul %66, %68, %cst_27 {dimension_numbers = #tpu.dot_dimension_numbers<[1], [0], [0], [1], [0, 0, 1, 1], [], []>} : vector<8x8xf32>, vector<8x32xf32>, vector<8x32xf32> -> vector<8x32xf32>
    %70 = vector.extract_strided_slice %62 {offsets = [1, 0, 0], sizes = [1, 8, 32], strides = [1, 1, 1]} : vector<2x8x32xf32> to vector<1x8x32xf32>
    %71 = vector.shape_cast %70 : vector<1x8x32xf32> to vector<8x32xf32>
    %cst_28 = arith.constant dense<0.000000e+00> : vector<8x32xf32>
    %72 = tpu.matmul %66, %71, %cst_28 {dimension_numbers = #tpu.dot_dimension_numbers<[1], [0], [0], [1], [0, 0, 1, 1], [], []>} : vector<8x8xf32>, vector<8x32xf32>, vector<8x32xf32> -> vector<8x32xf32>
    %73 = vector.shape_cast %69 : vector<8x32xf32> to vector<1x8x32xf32>
    %74 = vector.shape_cast %72 : vector<8x32xf32> to vector<1x8x32xf32>
    %75 = tpu.concatenate %73, %74 in 0 : vector<1x8x32xf32>, vector<1x8x32xf32> -> vector<2x8x32xf32>
    %76 = vector.broadcast %59 : vector<2x1x32xf32> to vector<2x8x32xf32>
    %77 = arith.addf %76, %75 : vector<2x8x32xf32>
    %78 = arith.mulf %65, %77 : vector<2x8x32xf32>
    %cst_29 = arith.constant 0.000000e+00 : f32
    %79 = vector.broadcast %cst_29 : f32 to vector<2x1x32xf32>
    %80 = arith.minimumf %41, %79 : vector<2x1x32xf32>
    %81 = math.exp %80 : vector<2x1x32xf32>
    %cst_30 = arith.constant 0.000000e+00 : f32
    %82 = vector.broadcast %cst_30 : f32 to vector<2x1x32xf32>
    %83 = arith.cmpf oge, %41, %82 : vector<2x1x32xf32>
    %cst_31 = arith.constant 5.000000e-01 : f32
    %84 = vector.broadcast %cst_31 : f32 to vector<2x1x32xf32>
    %85 = arith.addf %41, %84 : vector<2x1x32xf32>
    %cst_32 = arith.constant 1.000000e+00 : f32
    %86 = vector.broadcast %cst_32 : f32 to vector<2x1x32xf32>
    %87 = arith.addf %86, %81 : vector<2x1x32xf32>
    %88 = arith.divf %81, %87 : vector<2x1x32xf32>
    %89 = arith.select %83, %85, %88 : vector<2x1x32xi1>, vector<2x1x32xf32>
    %90 = tpu.concatenate %89, %78 in 1 : vector<2x1x32xf32>, vector<2x8x32xf32> -> vector<2x9x32xf32>
    %c0_33 = arith.constant 0 : index
    %c0_34 = arith.constant 0 : index
    %c0_35 = arith.constant 0 : index
    %91 = vector.load %arg7[%c0_33, %c0_34, %c0_35] : memref<2x9x32xf32, #tpu.memory_space<vmem>>, vector<2x9x32xf32>
    tpu.vector_store %arg7[%c0_33, %c0_34, %c0_35], %90 {strides = array<i32>} : memref<2x9x32xf32, #tpu.memory_space<vmem>>, vector<2x9x32xf32>,
    return
  }
  func.func @transform_0(%arg0: i32) -> (i32, i32, i32) {
    %c0_i32 = arith.constant 0 : i32
    %c0_i32_0 = arith.constant 0 : i32
    %c0_i32_1 = arith.constant 0 : i32
    return %arg0, %c0_i32, %c0_i32_0 : i32, i32, i32
  }
  func.func @transform_1(%arg0: i32) -> (i32, i32, i32) {
    %c0_i32 = arith.constant 0 : i32
    %c0_i32_0 = arith.constant 0 : i32
    %c0_i32_1 = arith.constant 0 : i32
    return %arg0, %c0_i32, %c0_i32_0 : i32, i32, i32
  }
  func.func @transform_2(%arg0: i32) -> (i32, i32) {
    %c0_i32 = arith.constant 0 : i32
    %c0_i32_0 = arith.constant 0 : i32
    %c0_i32_1 = arith.constant 0 : i32
    return %c0_i32, %c0_i32_0 : i32, i32
  }
  func.func @transform_3(%arg0: i32) -> (i32, i32) {
    %c0_i32 = arith.constant 0 : i32
    %c0_i32_0 = arith.constant 0 : i32
    %c0_i32_1 = arith.constant 0 : i32
    return %c0_i32, %c0_i32_0 : i32, i32
  }
  func.func @transform_4(%arg0: i32) -> (i32, i32) {
    %c0_i32 = arith.constant 0 : i32
    %c0_i32_0 = arith.constant 0 : i32
    %c0_i32_1 = arith.constant 0 : i32
    return %c0_i32, %c0_i32_0 : i32, i32
  }
  func.func @transform_5(%arg0: i32) -> (i32, i32) {
    %c0_i32 = arith.constant 0 : i32
    %c0_i32_0 = arith.constant 0 : i32
    %c0_i32_1 = arith.constant 0 : i32
    return %c0_i32, %c0_i32_0 : i32, i32
  }
  func.func @transform_6(%arg0: i32) -> (i32, i32, i32) {
    %c0_i32 = arith.constant 0 : i32
    %c0_i32_0 = arith.constant 0 : i32
    %c0_i32_1 = arith.constant 0 : i32
    return %arg0, %c0_i32, %c0_i32_0 : i32, i32, i32
  }
}

</mosaic_0001>

<llo_original>
// kernel: tpu_custom_call.1
$region0: #{tpu_custom_call.1}
  #allocation0 [shape = 'u32[]', space=smem, size = 0x4, offset = 0x4, fixed_abs, tag = 'smem constant byte address 0x4 - core index']
  #allocation1 [shape = 'u32[72,128]{1,0:T(1,128)}', space=vmem, size = 0x9000, scoped, tag = 'internal scratch']
  %s0 = inlined_call_operand.hbm [shape: f32[2,8,16], index: 0, kind: input, shape index: {}]
  %s1 = inlined_call_operand.hbm [shape: f32[2,1,32], index: 1, kind: input, shape index: {}]
  %s2 = inlined_call_operand.hbm [shape: f32[16,64], index: 2, kind: input, shape index: {}]
  %s3 = inlined_call_operand.vmem [shape: f32[1,64], index: 3, kind: input, shape index: {}]
  %s4 = inlined_call_operand.hbm [shape: f32[32,32], index: 4, kind: input, shape index: {}]
  %s5 = inlined_call_operand.hbm [shape: f32[8,8], index: 5, kind: input, shape index: {}]
  %s6 = inlined_call_operand.vmem [shape: f32[2,9,32], index: 6, kind: output, shape index: {}]
  %s7 = sld [smem:[#allocation0]]
  $region54: #{tpu_custom_call.1} parent=0
    _
  %s9 = ssub.s32 1, %s7
  %s10 = scalar_select 0, %s9, %s7
  $region1: #{tpu_custom_call.1} parent=0
    #allocation2 [shape = 'u8[8192]{0}', space=vmem, size = 0x2000, scoped, tag = 'input window, operand 0, single buffered']
    #allocation3 [shape = 's32[1]{0}', space=sflag, size = 0x4, scoped, tag = 'scoped memory for tpu_custom_call.1']
    #allocation4 [shape = 'u8[1024]{0}', space=vmem, size = 0x400, scoped, tag = 'input window, operand 1, single buffered']
    #allocation5 [shape = 's32[1]{0}', space=sflag, size = 0x4, scoped, tag = 'scoped memory for tpu_custom_call.1']
    #allocation6 [shape = 'u8[8192]{0}', space=vmem, size = 0x2000, scoped, tag = 'input window, operand 2, single buffered']
    #allocation7 [shape = 'u8[16384]{0}', space=vmem, size = 0x4000, scoped, tag = 'input window, operand 4, single buffered']
    #allocation8 [shape = 's32[1]{0}', space=sflag, size = 0x4, scoped, tag = 'scoped memory for tpu_custom_call.1']
    #allocation9 [shape = 'u8[4096]{0}', space=vmem, size = 0x1000, scoped, tag = 'input window, operand 5, single buffered']
    %11 = vsyncpa [#allocation3], 0
    %12 = vsyncpa [#allocation5], 0
    %13 = vsyncpa [#allocation8], 0
    // Predicated region
    $region2: #{tpu_custom_call.1} parent=1 // pred_check
      _
    $region3: #{tpu_custom_call.1} parent=1 // pred_check_branch
      %15 = sbr.rel (0) target = $region5
    $region4: #{tpu_custom_call.1} parent=1 // pred_region
      %17 = vsyncadd [#allocation3], 0
      %s18 = sshll.u32 %s0, 4
      %s19 = int_to_ptr.hbm [resolvable:$true] %s18
      %s20 = sshll.u32 [#allocation2], 4
      %s21 = int_to_ptr.vmem [resolvable:$true] %s20
      %26 = dma.hbm_to_vmem [thread:$0]  %s19, 256, %s21, [#allocation3], 128, 128, 8
    $region5: #{tpu_custom_call.1} parent=1 // pred_fallthru
      _
    // Predicated region
    $region6: #{tpu_custom_call.1} parent=1 // pred_check
      _
    $region7: #{tpu_custom_call.1} parent=1 // pred_check_branch
      %28 = sbr.rel (0) target = $region9
    $region8: #{tpu_custom_call.1} parent=1 // pred_region
      %30 = vsyncadd [#allocation5], 0
      %s31 = sshll.u32 %s1, 4
      %s32 = int_to_ptr.hbm [resolvable:$true] %s31
      %s33 = sshll.u32 [#allocation4], 4
      %s34 = int_to_ptr.vmem [resolvable:$true] %s33
      %39 = dma.hbm_to_vmem [thread:$0]  %s32, 32, %s34, [#allocation5], 16, 16, 1
    $region9: #{tpu_custom_call.1} parent=1 // pred_fallthru
      _
    // Predicated region
    $region10: #{tpu_custom_call.1} parent=1 // pred_check
      _
    $region11: #{tpu_custom_call.1} parent=1 // pred_check_branch
      %41 = sbr.rel (0) target = $region13
    $region12: #{tpu_custom_call.1} parent=1 // pred_region
      %43 = vsyncadd [#allocation5], 0
      %s44 = sshll.u32 %s2, 4
      %s45 = int_to_ptr.hbm [resolvable:$true] %s44
      %s46 = sshll.u32 [#allocation6], 4
      %s47 = int_to_ptr.vmem [resolvable:$true] %s46
      %52 = dma.hbm_to_vmem [thread:$0]  %s45, 256, %s47, [#allocation5], 128, 128, 8
    $region13: #{tpu_custom_call.1} parent=1 // pred_fallthru
      _
    // Predicated region
    $region14: #{tpu_custom_call.1} parent=1 // pred_check
      _
    $region15: #{tpu_custom_call.1} parent=1 // pred_check_branch
      %54 = sbr.rel (0) target = $region17
    $region16: #{tpu_custom_call.1} parent=1 // pred_region
      _
    $region17: #{tpu_custom_call.1} parent=1 // pred_fallthru
      _
    // Predicated region
    $region18: #{tpu_custom_call.1} parent=1 // pred_check
      _
    $region19: #{tpu_custom_call.1} parent=1 // pred_check_branch
      %56 = sbr.rel (0) target = $region21
    $region20: #{tpu_custom_call.1} parent=1 // pred_region
      %58 = vsyncadd [#allocation8], 0
      %s59 = sshll.u32 %s4, 4
      %s60 = int_to_ptr.hbm [resolvable:$true] %s59
      %s61 = sshll.u32 [#allocation7], 4
      %s62 = int_to_ptr.vmem [resolvable:$true] %s61
      %67 = dma.hbm_to_vmem [thread:$0]  %s60, 512, %s62, [#allocation8], 128, 128, 8
    $region21: #{tpu_custom_call.1} parent=1 // pred_fallthru
      _
    // Predicated region
    $region22: #{tpu_custom_call.1} parent=1 // pred_check
      _
    $region23: #{tpu_custom_call.1} parent=1 // pred_check_branch
      %69 = sbr.rel (0) target = $region25
    $region24: #{tpu_custom_call.1} parent=1 // pred_region
      %71 = vsyncadd [#allocation8], 0
      %s73 = sshll.u32 %s5, 4
      %s74 = int_to_ptr.hbm [resolvable:$true] %s73
      %s75 = sshll.u32 [#allocation9], 4
      %s76 = int_to_ptr.vmem [resolvable:$true] %s75
      %78 = dma.hbm_to_vmem [thread:$0]  %s74, 128, %s76, [#allocation8]
    $region25: #{tpu_custom_call.1} parent=1 // pred_fallthru
      _
    // Predicated region
    $region26: #{tpu_custom_call.1} parent=1 // pred_check
      _
    $region27: #{tpu_custom_call.1} parent=1 // pred_check_branch
      %80 = sbr.rel (0) target = $region29
    $region28: #{tpu_custom_call.1} parent=1 // pred_region
      %82 = dma.done [#allocation3], 256
    $region29: #{tpu_custom_call.1} parent=1 // pred_fallthru
      _
    // Predicated region
    $region30: #{tpu_custom_call.1} parent=1 // pred_check
      _
    $region31: #{tpu_custom_call.1} parent=1 // pred_check_branch
      %84 = sbr.rel (0) target = $region33
    $region32: #{tpu_custom_call.1} parent=1 // pred_region
      %86 = dma.done [#allocation5], 32
    $region33: #{tpu_custom_call.1} parent=1 // pred_fallthru
      _
    // Predicated region
    $region34: #{tpu_custom_call.1} parent=1 // pred_check
      _
    $region35: #{tpu_custom_call.1} parent=1 // pred_check_branch
      %88 = sbr.rel (0) target = $region37
    $region36: #{tpu_custom_call.1} parent=1 // pred_region
      %90 = dma.done [#allocation5], 256
    $region37: #{tpu_custom_call.1} parent=1 // pred_fallthru
      _
    // Predicated region
    $region38: #{tpu_custom_call.1} parent=1 // pred_check
      _
    $region39: #{tpu_custom_call.1} parent=1 // pred_check_branch
      %92 = sbr.rel (0) target = $region41
    $region40: #{tpu_custom_call.1} parent=1 // pred_region
      %94 = dma.done [#allocation8], 512
    $region41: #{tpu_custom_call.1} parent=1 // pred_fallthru
      _
    // Predicated region
    $region42: #{tpu_custom_call.1} parent=1 // pred_check
      _
    $region43: #{tpu_custom_call.1} parent=1 // pred_check_branch
      %96 = sbr.rel (0) target = $region45
    $region44: #{tpu_custom_call.1} parent=1 // pred_region
      %98 = dma.done [#allocation8], 128
    $region45: #{tpu_custom_call.1} parent=1 // pred_fallthru
      _
    %v99 = vld [vmem:[#allocation2] sm:$0xff]
    %v100 = vld [vmem:[#allocation2 + $0x8] sm:$0xff]
    %v101 = vld [vmem:[#allocation6] sm:$0xff]
    %v102 = vld [vmem:[#allocation6 + $0x8] sm:$0xff]
    %v103 = vld [vmem:[%s3] sm:$0x1]
    %v105 = vperm.slane %v103, 0
    %vm107 = vcmask 130048
    %v109 = vsel %vm107, %v99, 0
    %v112 = vsel %vm107, %v100, 0
    %114 = vmatpush.msra.mxu0 0.0
    %115 = vmatpush.msra.mxu0 0.0
    %116 = vmatpush.msra.mxu0 0.0
    %117 = vmatpush.msra.mxu0 0.0
    %118 = vmatpush.msra.mxu0 0.0
    %119 = vmatpush.msra.mxu0 0.0
    %120 = vmatpush.msra.mxu0 0.0
    %121 = vmatpush.msra.mxu0 0.0
    %122 = vmatpush.msra.mxu0 0.0
    %123 = vmatpush.msra.mxu0 0.0
    %124 = vmatpush.msra.mxu0 0.0
    %125 = vmatpush.msra.mxu0 0.0
    %126 = vmatpush.msra.mxu0 0.0
    %127 = vmatpush.msra.mxu0 0.0
    %128 = vmatpush.msra.mxu0 %v102
    %129 = vmatpush.msra.mxu0 %v101
    %130 = vmatmul.f32.gmra.mxu0 %v109
    %v131 = vpop.f32.mrf.mxu0
    %v132 = vadd.f32 %v105, %v131
    %133 = vmatmul.f32.gmra.mxu0 %v112
    %v134 = vpop.f32.mrf.mxu0
    %v135 = vadd.f32 %v105, %v134
    %136 = vdwg.mxu0
    %v137 = vmax.f32 %v132, 0.0
    %v138 = vmax.f32 %v135, 0.0
    %v139 = vand.u32 2147483647, %v132
    %v140 = vand.u32 2147483647, %v135
    %v141 = vsub.f32 0.0, %v139
    %v142 = vsub.f32 0.0, %v140
    %v143 = vmul.f32 %v141, 1.442695
    %v144 = vpow.pop %v143
    %v145 = vmul.f32 %v142, 1.442695
    %v146 = vpow.pop %v145
    %v147 = vadd.f32 %v144, 1.0
    %v148 = vadd.f32 %v146, 1.0
    %v149 = vlog2.pop %v147
    %v150 = vmul.f32 %v149, 0.6931472
    %v151 = vlog2.pop %v148
    %v152 = vmul.f32 %v151, 0.6931472
    %v153 = vadd.f32 %v137, %v150
    %v154 = vadd.f32 %v138, %v152
    %v155 = vsub.f32 0.0, %v153
    %v156 = vsub.f32 0.0, %v154
    %v157 = vsub.f32 %v132, %v153
    %v158 = vsub.f32 %v135, %v154
    %vm159 = vcmp.ge.f32.partialorder %v132, 0.0
    %vm160 = vcmp.ge.f32.partialorder %v135, 0.0
    %v161 = vmin.f32 %v132, 0.0
    %v162 = vmin.f32 %v135, 0.0
    %v163 = vmul.f32 %v161, 1.442695
    %v164 = vpow.pop %v163
    %v165 = vmul.f32 %v162, 1.442695
    %v166 = vpow.pop %v165
    %v167 = vadd.f32 %v132, 0.5
    %v168 = vadd.f32 %v135, 0.5
    %v169 = vadd.f32 %v164, 1.0
    %v170 = vadd.f32 %v166, 1.0
    %v171 = vsel %vm159, %v167, %v169
    %v172 = vsel %vm160, %v168, %v170
    %v173 = vlog2.pop %v171
    %v174 = vmul.f32 %v173, 0.6931472
    %v175 = vlog2.pop %v172
    %v176 = vmul.f32 %v175, 0.6931472
    %v177 = vsub.f32 %v132, %v174
    %v178 = vsub.f32 %v135, %v176
    %v179 = vsel %vm159, %v174, %v177
    %v180 = vsel %vm160, %v176, %v178
    %v181 = vld [vmem:[#allocation7] sm:$0xff]
    %v182 = vld [vmem:[#allocation7 + $0x8] sm:$0xff]
    %v183 = vld [vmem:[#allocation7 + $0x10] sm:$0xff]
    %v184 = vld [vmem:[#allocation7 + $0x18] sm:$0xff]
    %vm185 = vcmask 261120
    %v187 = vsel %vm185, %v155, 0
    %v190 = vsel %vm185, %v156, 0
    %192 = vmatpush.msra.mxu0 0.0
    %193 = vmatpush.msra.mxu0 0.0
    %194 = vmatpush.msra.mxu0 0.0
    %195 = vmatpush.msra.mxu0 0.0
    %196 = vmatpush.msra.mxu0 0.0
    %197 = vmatpush.msra.mxu0 0.0
    %198 = vmatpush.msra.mxu0 0.0
    %199 = vmatpush.msra.mxu0 0.0
    %200 = vmatpush.msra.mxu0 0.0
    %201 = vmatpush.msra.mxu0 0.0
    %202 = vmatpush.msra.mxu0 0.0
    %203 = vmatpush.msra.mxu0 0.0
    %204 = vmatpush.msra.mxu0 %v184
    %205 = vmatpush.msra.mxu0 %v183
    %206 = vmatpush.msra.mxu0 %v182
    %207 = vmatpush.msra.mxu0 %v181
    %208 = vmatmul.f32.gmra.mxu0 %v187
    %v209 = vpop.f32.mrf.mxu0
    %v210 = vadd.f32 0.0, %v209
    %211 = vmatmul.f32.gmra.mxu0 %v190
    %v212 = vpop.f32.mrf.mxu0
    %v213 = vadd.f32 0.0, %v212
    %214 = vdwg.mxu0
    %217 = vrot.lane.b32.xlu0 %v179, 96
    %v218 = vpop.permute.xlu0 %217
    %219 = vrot.lane.b32.xlu0 %v180, 96
    %v220 = vpop.permute.xlu0 %219
    %v223 = vadd.f32 %v157, %v218
    %v224 = vadd.f32 %v158, %v220
    %v225 = vsub.f32 %v223, %v210
    %v226 = vsub.f32 %v224, %v213
    %v227 = vld [vmem:[#allocation4] sm:$0x1]
    %v228 = vld [vmem:[#allocation4 + $0x1] sm:$0x1]
    %vm229 = vcmp.ge.f32.partialorder %v227, 0.0
    %vm230 = vcmp.ge.f32.partialorder %v228, 0.0
    %v231 = vmin.f32 %v227, 0.0
    %v232 = vmin.f32 %v228, 0.0
    %v233 = vmul.f32 %v231, 1.442695
    %v234 = vpow.pop %v233
    %v235 = vmul.f32 %v232, 1.442695
    %v236 = vpow.pop %v235
    %v237 = vadd.f32 %v227, 0.5
    %v238 = vadd.f32 %v228, 0.5
    %v239 = vadd.f32 %v234, 1.0
    %v240 = vadd.f32 %v236, 1.0
    %v241 = vsel %vm229, %v237, %v239
    %v242 = vsel %vm230, %v238, %v240
    %v243 = vlog2.pop %v241
    %v244 = vmul.f32 %v243, 0.6931472
    %v245 = vlog2.pop %v242
    %v246 = vmul.f32 %v245, 0.6931472
    %v247 = vsub.f32 %v227, %v244
    %v248 = vsub.f32 %v228, %v246
    %v249 = vsel %vm229, %v244, %v247
    %v250 = vsel %vm230, %v246, %v248
    %v251 = vsel %vm185, %v225, -inf
    %v252 = vrot.slane %v251, 4
    %v253 = vmax.f32 %v251, %v252
    %v254 = vrot.slane %v253, 2
    %v255 = vmax.f32 %v253, %v254
    %v256 = vrot.slane %v255, 1
    %v257 = vmax.f32 %v255, %v256
    %v258 = vsel %vm185, %v226, -inf
    %v259 = vrot.slane %v258, 4
    %v260 = vmax.f32 %v258, %v259
    %v261 = vrot.slane %v260, 2
    %v262 = vmax.f32 %v260, %v261
    %v263 = vrot.slane %v262, 1
    %v264 = vmax.f32 %v262, %v263
    %v265 = vmax.f32 %v257, %v249
    %v266 = vmax.f32 %v264, %v250
    %v267 = vsub.f32 %v249, %v265
    %v268 = vsub.f32 %v250, %v266
    %v269 = vmul.f32 %v267, 1.442695
    %v270 = vpow.pop %v269
    %v271 = vmul.f32 %v268, 1.442695
    %v272 = vpow.pop %v271
    %v273 = vperm.slane %v265, 0
    %v274 = vperm.slane %v266, 0
    %v275 = vsub.f32 %v225, %v273
    %v276 = vsub.f32 %v226, %v274
    %v277 = vmul.f32 %v275, 1.442695
    %v278 = vpow.pop %v277
    %v279 = vmul.f32 %v276, 1.442695
    %v280 = vpow.pop %v279
    %v281 = vadd.f32 %v210, %v273
    %v282 = vadd.f32 %v213, %v274
    %v283 = vmul.f32 %v281, 1.442695
    %v284 = vpow.pop %v283
    %v285 = vmul.f32 %v282, 1.442695
    %v286 = vpow.pop %v285
    %v287 = vld [vmem:[#allocation9] sm:$0xff]
    %vm288 = vcmask 64512
    %v290 = vsel %vm288, %v287, 0
    %292 = vmatpush.msra.mxu0 0.0
    %293 = vmatpush.msra.mxu0 0.0
    %294 = vmatpush.msra.mxu0 0.0
    %295 = vmatpush.msra.mxu0 0.0
    %296 = vmatpush.msra.mxu0 0.0
    %297 = vmatpush.msra.mxu0 0.0
    %298 = vmatpush.msra.mxu0 0.0
    %299 = vmatpush.msra.mxu0 0.0
    %300 = vmatpush.msra.mxu0 0.0
    %301 = vmatpush.msra.mxu0 0.0
    %302 = vmatpush.msra.mxu0 0.0
    %303 = vmatpush.msra.mxu0 0.0
    %304 = vmatpush.msra.mxu0 0.0
    %305 = vmatpush.msra.mxu0 0.0
    %306 = vmatpush.msra.mxu0 0.0
    %307 = vmatpush.msra.mxu0 %v278
    %308 = vmatmul.f32.gmra.mxu0 %v290
    %v309 = vpop.f32.mrf.mxu0
    %v310 = vadd.f32 0.0, %v309
    %311 = vdwg.mxu0
    %312 = vmatpush.msra.mxu0 0.0
    %313 = vmatpush.msra.mxu0 0.0
    %314 = vmatpush.msra.mxu0 0.0
    %315 = vmatpush.msra.mxu0 0.0
    %316 = vmatpush.msra.mxu0 0.0
    %317 = vmatpush.msra.mxu0 0.0
    %318 = vmatpush.msra.mxu0 0.0
    %319 = vmatpush.msra.mxu0 0.0
    %320 = vmatpush.msra.mxu0 0.0
    %321 = vmatpush.msra.mxu0 0.0
    %322 = vmatpush.msra.mxu0 0.0
    %323 = vmatpush.msra.mxu0 0.0
    %324 = vmatpush.msra.mxu0 0.0
    %325 = vmatpush.msra.mxu0 0.0
    %326 = vmatpush.msra.mxu0 0.0
    %327 = vmatpush.msra.mxu0 %v280
    %328 = vmatmul.f32.gmra.mxu0 %v290
    %v329 = vpop.f32.mrf.mxu0
    %v330 = vadd.f32 0.0, %v329
    %331 = vdwg.mxu0
    %v334 = vperm.slane %v270, 0
    %v335 = vperm.slane %v272, 0
    %v338 = vadd.f32 %v334, %v310
    %v339 = vadd.f32 %v335, %v330
    %v340 = vmul.f32 %v284, %v338
    %v341 = vmul.f32 %v286, %v339
    %v342 = vrcp.pop %v239
    %v343 = vmul.f32 %v239, %v342
    %v344 = vsub.f32 1.0, %v343
    %v345 = vmul.f32 %v342, %v344
    %v346 = vadd.f32 %v342, %v345
    %vm347 = vweird.f32 %v239
    %vm348 = vweird.f32 %v342
    %vm349 = vmor %vm347, %vm348
    %v350 = vsel %vm349, %v342, %v346
    %v351 = vand.u32 2147483647, %v239
    %vm352 = vcmp.eq.f32.partialorder %v351, 8.507059e+37
    %v353 = vand.u32 %v239, 2147483648
    %v354 = vor.u32 1.1754944e-38, %v353
    %v355 = vsel %vm352, %v354, %v350
    %v356 = vmul.f32 %v234, %v355
    %v357 = vrcp.pop %v240
    %v358 = vmul.f32 %v240, %v357
    %v359 = vsub.f32 1.0, %v358
    %v360 = vmul.f32 %v357, %v359
    %v361 = vadd.f32 %v357, %v360
    %vm362 = vweird.f32 %v240
    %vm363 = vweird.f32 %v357
    %vm364 = vmor %vm362, %vm363
    %v365 = vsel %vm364, %v357, %v361
    %v366 = vand.u32 2147483647, %v240
    %vm367 = vcmp.eq.f32.partialorder %v366, 8.507059e+37
    %v368 = vand.u32 %v240, 2147483648
    %v369 = vor.u32 1.1754944e-38, %v368
    %v370 = vsel %vm367, %v369, %v365
    %v371 = vmul.f32 %v236, %v370
    %v372 = vsel %vm229, %v237, %v356
    %v373 = vsel %vm230, %v238, %v371
    %v376 = vrot.slane %v340, 7
    %v377 = vrot.slane %v341, 7
    %vm380 = vcmask 1040384
    %v381 = vsel %vm380, %v372, %v376
    %v382 = vsel %vm380, %v373, %v377
    %383 = vst.msk [vmem:[%s6] sm:$0xff] %vm185, %v381
    %vm384 = vcmask 253952
    %385 = vst.msk [vmem:[%s6 + $0x8] sm:$0x1] %vm384, %v376
    %386 = vst.msk [vmem:[%s6 + $0x10] sm:$0xff] %vm185, %v382
    %387 = vst.msk [vmem:[%s6 + $0x18] sm:$0x1] %vm384, %v377
    // Predicated region
    $region46: #{tpu_custom_call.1} parent=1 // pred_check
      _
    $region47: #{tpu_custom_call.1} parent=1 // pred_check_branch
      %389 = sbr.rel (0) target = $region49
    $region48: #{tpu_custom_call.1} parent=1 // pred_region
      _
    $region49: #{tpu_custom_call.1} parent=1 // pred_fallthru
      _
    // Predicated region
    $region50: #{tpu_custom_call.1} parent=1 // pred_check
      _
    $region51: #{tpu_custom_call.1} parent=1 // pred_check_branch
      %391 = sbr.rel (0) target = $region53
    $region52: #{tpu_custom_call.1} parent=1 // pred_region
      _
    $region53: #{tpu_custom_call.1} parent=1 // pred_fallthru
      _
    %392 = vsyncpa [#allocation3], 1
    %393 = vsyncpa [#allocation5], 1
    %394 = vsyncpa [#allocation8], 1

</llo_original>
